<compile_context>
chip_gen: v5e
topology: v5e:2x2
jax: 0.10.0
libtpu: 0.0.40
codegen_flags: <defaults>
</compile_context>

<pallas_src>
import functools
import math

import jax
import jax.numpy as jnp
from jax.experimental import pallas as pl
from jax.experimental.pallas import tpu as pltpu

LANE = 128
VMEM_LIMIT_BYTES = 48 * 1024 * 1024          # safe on v5e/v6e (128 MiB) and v7x (64 MiB)
FEAT_RESIDENT_BUDGET = 16 * 1024 * 1024      # one copy of the resident feature operand


def _round_up(x, m):
    return (x + m - 1) // m * m


def _pad2(a, rows, cols):
    return jnp.pad(a, ((0, rows - a.shape[0]), (0, cols - a.shape[1])))


def _feat_block(feat_ref, k, tk):
    """Current (tk, F) slab of the feature operand, streamed or VMEM-resident."""
    if feat_ref.shape[0] == tk:               # streamed per-k block
        return feat_ref[...]
    start = pl.multiple_of(k * tk, tk)        # fully resident operand: slice rows
    return feat_ref[pl.ds(start, tk), :]


# ---------------------------------------------------------------------------
# Layer 1 kernel (fused):  HW2 = relu((A_hat @ X) @ W1 + b1) @ W2
# Aggregation streams bf16 A_hat tiles into a narrow f32 accumulator; both small
# projections + bias + ReLU happen once per row tile in the epilogue (bf16 MXU,
# f32 elementwise), and the intermediate is written out lane-dense in bf16.
# ---------------------------------------------------------------------------
def _layer1_kernel(tk, a_ref, x_ref, w1_ref, w2_ref, b1_ref, o_ref, acc_ref):
    k = pl.program_id(1)

    @pl.when(k == 0)
    def _():
        acc_ref[...] = jnp.zeros_like(acc_ref)

    acc_ref[...] += jnp.dot(a_ref[...], _feat_block(x_ref, k, tk),
                            preferred_element_type=jnp.float32)

    @pl.when(k == pl.num_programs(1) - 1)
    def _():
        h = jnp.dot(acc_ref[...].astype(jnp.bfloat16), w1_ref[...],
                    preferred_element_type=jnp.float32) + b1_ref[...]
        h = jnp.maximum(h, 0.0)               # ReLU; dropout(eval) == identity
        o_ref[...] = jnp.dot(h.astype(jnp.bfloat16), w2_ref[...],
                             preferred_element_type=jnp.float32).astype(o_ref.dtype)


# ---------------------------------------------------------------------------
# Layer 2 kernel (pure aggregation):  out = A_hat @ HW2 + b2
# ---------------------------------------------------------------------------
def _layer2_kernel(tk, a_ref, hw2_ref, b2_ref, o_ref, acc_ref):
    k = pl.program_id(1)

    @pl.when(k == 0)
    def _():
        acc_ref[...] = jnp.zeros_like(acc_ref)

    acc_ref[...] += jnp.dot(a_ref[...], _feat_block(hw2_ref, k, tk),
                            preferred_element_type=jnp.float32)

    @pl.when(k == pl.num_programs(1) - 1)
    def _():
        o_ref[...] = acc_ref[...] + b2_ref[...]


def _run_layer(kernel, a_p, feat_p, resident_args, *, acc_cols, out_cols, out_dtype,
               tm, tk, feat_resident, extra_flops=0):
    """Shared pallas_call plumbing for both GCN layers."""
    n_pad = a_p.shape[0]
    f_cols = feat_p.shape[1]
    grid = (n_pad // tm, n_pad // tk)

    if feat_resident:
        feat_spec = pl.BlockSpec((n_pad, f_cols), lambda i, k: (0, 0))  # DMA'd once
        feat_reads = 1
    else:
        feat_spec = pl.BlockSpec((tk, f_cols), lambda i, k: (k, 0))
        feat_reads = grid[0]

    resident_specs = [pl.BlockSpec(arr.shape, lambda i, k: (0, 0)) for arr in resident_args]
    resident_bytes = sum(int(arr.size) * arr.dtype.itemsize for arr in resident_args)

    cost = pl.CostEstimate(
        flops=int(2 * n_pad * n_pad * acc_cols + extra_flops),
        transcendentals=0,
        bytes_accessed=int(a_p.size * a_p.dtype.itemsize
                           + feat_reads * feat_p.size * feat_p.dtype.itemsize
                           + resident_bytes
                           + n_pad * out_cols * jnp.dtype(out_dtype).itemsize),
    )

    return pl.pallas_call(
        functools.partial(kernel, tk),
        out_shape=jax.ShapeDtypeStruct((n_pad, out_cols), out_dtype),
        grid_spec=pltpu.PrefetchScalarGridSpec(
            num_scalar_prefetch=0,
            grid=grid,
            in_specs=[pl.BlockSpec((tm, tk), lambda i, k: (i, k)),  # A_hat tile (bf16)
                      feat_spec] + resident_specs,
            out_specs=pl.BlockSpec((tm, out_cols), lambda i, k: (i, 0)),
            scratch_shapes=[pltpu.VMEM((tm, acc_cols), jnp.float32)],
        ),
        compiler_params=pltpu.CompilerParams(
            dimension_semantics=("parallel", "arbitrary"),
            vmem_limit_bytes=VMEM_LIMIT_BYTES,
        ),
        cost_estimate=cost,
    )(a_p, feat_p, *resident_args)


def _choose_tiles(n, tm, tk):
    """Clamp tiles to the problem, pad N so both tiles divide it, keep 2 row blocks."""
    n_min = _round_up(n, LANE)
    tm = min(tm, n_min)
    tk = min(tk, n_min)
    n_pad = _round_up(n, math.lcm(tm, tk))
    # v7x megacore: try to give both TensorCores at least one row block.
    while n_pad // tm < 2 and tm > LANE:
        tm //= 2
    assert tm % 8 == 0 and tk % LANE == 0 and n_pad % tm == 0 and n_pad % tk == 0
    return n_pad, tm, tk


def build_normalized_adjacency_padded(edge_index, num_nodes, n_pad):
    """Padded bf16 D^-1/2 (A + I) D^-1/2 from COO edge_index [2, E] (src row 0, dst row 1).

    Degrees come from the edge list (no dense reduce pass); the dense array gets a
    single fused normalize+cast pass.  Padded rows/cols are exactly zero (no NaN/inf).
    """
    src = edge_index[0].astype(jnp.int32)
    dst = edge_index[1].astype(jnp.int32)
    idx = jnp.arange(num_nodes, dtype=jnp.int32)

    # message flows src -> dst, so aggregation matrix row = dst, col = src
    a = jnp.zeros((n_pad, n_pad), jnp.float32)
    a = a.at[dst, src].add(1.0)
    a = a.at[idx, idx].set(1.0)               # self loops forced to exactly 1

    not_self = (src != dst).astype(jnp.float32)
    deg = jnp.zeros((n_pad,), jnp.float32).at[dst].add(not_self)
    deg = deg.at[idx].add(1.0)                # + self loop
    d_inv_sqrt = jnp.where(deg > 0.0, jax.lax.rsqrt(jnp.maximum(deg, 1.0)), 0.0)

    return (d_inv_sqrt[:, None] * a * d_inv_sqrt[None, :]).astype(jnp.bfloat16)


def init_params(key, num_features, hidden_channels, num_classes):
    """Deterministic glorot-style init (GCNConv: glorot weight, zero bias)."""
    k1, k2 = jax.random.split(key)

    def glorot(k, fan_in, fan_out):
        limit = jnp.sqrt(6.0 / (fan_in + fan_out))
        return jax.random.uniform(k, (fan_in, fan_out), jnp.float32, -limit, limit)

    w1 = glorot(k1, num_features, hidden_channels)
    b1 = jnp.zeros((1, hidden_channels), jnp.float32)
    w2 = glorot(k2, hidden_channels, num_classes)
    b2 = jnp.zeros((1, num_classes), jnp.float32)
    return w1, b1, w2, b2


def gcnnet_forward(x, edge_index, params, *, tm=512, tk=1024):
    """2-layer GCN forward. x: [N, F] f32, edge_index: [2, E] int32."""
    w1, b1, w2, b2 = params
    n, f = x.shape
    hid = w1.shape[1]
    c = w2.shape[1]

    n_pad, tm, tk = _choose_tiles(n, tm, tk)
    f_pad = _round_up(f, LANE)
    h_pad = _round_up(hid, LANE)
    c_pad = _round_up(c, LANE)

    a_p = build_normalized_adjacency_padded(edge_index, n, n_pad)
    x_p = _pad2(x, n_pad, f_pad).astype(jnp.bfloat16)
    w1_p = _pad2(w1, f_pad, h_pad).astype(jnp.bfloat16)
    b1_p = _pad2(b1.reshape(1, -1), 1, h_pad).astype(jnp.float32)
    w2_p = _pad2(w2, h_pad, c_pad).astype(jnp.bfloat16)
    b2_p = _pad2(b2.reshape(1, -1), 1, c_pad).astype(jnp.float32)

    # Layer 1 (fused): HW2 = relu((A @ X) @ W1 + b1) @ W2   (dropout eval == identity)
    hw2 = _run_layer(
        _layer1_kernel, a_p, x_p, (w1_p, w2_p, b1_p),
        acc_cols=f_pad, out_cols=c_pad, out_dtype=jnp.bfloat16,
        tm=tm, tk=tk,
        feat_resident=(2 * n_pad * f_pad <= FEAT_RESIDENT_BUDGET),
        extra_flops=2 * n_pad * (f_pad * h_pad + h_pad * c_pad),
    )

    # Layer 2 (pure aggregation): out = A @ HW2 + b2
    out = _run_layer(
        _layer2_kernel, a_p, hw2, (b2_p,),
        acc_cols=c_pad, out_cols=c_pad, out_dtype=jnp.float32,
        tm=tm, tk=tk,
        feat_resident=(2 * n_pad * c_pad <= FEAT_RESIDENT_BUDGET),
    )

    return out[:n, :c]


def _reference_forward(x, edge_index, params):
    """Plain-JAX f32 reference for correctness checking."""
    w1, b1, w2, b2 = params
    n = x.shape[0]
    src, dst = edge_index[0], edge_index[1]
    a = jnp.zeros((n, n), jnp.float32).at[dst, src].add(1.0)
    eye = jnp.eye(n, dtype=jnp.float32)
    a = a * (1.0 - eye) + eye
    deg = jnp.sum(a, axis=1)
    d = 1.0 / jnp.sqrt(deg)
    a_hat = d[:, None] * a * d[None, :]
    h = jnp.maximum(a_hat @ (x @ w1) + b1, 0.0)
    return a_hat @ (h @ w2) + b2


if __name__ == "__main__":
    num_nodes = 16
    num_features = 8
    hidden_channels = 32
    num_classes = 4

    key = jax.random.PRNGKey(0)
    kx, kp = jax.random.split(key)

    # node features [N, F]
    x = jax.random.normal(kx, (num_nodes, num_features), jnp.float32)

    # simple deterministic ring graph (both directions), no self loops / duplicates
    src = jnp.arange(num_nodes, dtype=jnp.int32)
    dst = (src + 1) % num_nodes
    edge_index = jnp.stack(
        [jnp.concatenate([src, dst]), jnp.concatenate([dst, src])], axis=0
    )  # [2, 2N]

    params = init_params(kp, num_features, hidden_channels, num_classes)

    out = gcnnet_forward(x, edge_index, params)
    out = jax.block_until_ready(out)
    assert out.shape == (num_nodes, num_classes)
    assert out.dtype == jnp.float32

    ref = _reference_forward(x, edge_index, params)
    assert jnp.allclose(out, ref, rtol=5e-2, atol=5e-2), "mismatch vs f32 reference"

    print("KERNEL_OK")
</pallas_src>

<mosaic_0001>
module attributes {stable_mosaic.version = 11 : i64} {
  func.func @_layer1_kernel(%arg0: i32, %arg1: i32, %arg2: memref<128x128xbf16, #tpu.memory_space<vmem>>, %arg3: memref<128x128xbf16, #tpu.memory_space<vmem>>, %arg4: memref<128x128xbf16, #tpu.memory_space<vmem>>, %arg5: memref<128x128xbf16, #tpu.memory_space<vmem>>, %arg6: memref<1x128xf32, #tpu.memory_space<vmem>>, %arg7: memref<128x128xbf16, #tpu.memory_space<vmem>>, %arg8: memref<128x128xf32, #tpu.memory_space<vmem>>) attributes {dimension_semantics = [#tpu.dimension_semantics<parallel>, #tpu.dimension_semantics<arbitrary>], iteration_bounds = array<i64: 1, 1>, scalar_prefetch = 0 : i64, scratch_operands = 1 : i64, tpu.core_type = #tpu.core_type<tc>, window_params = [{transform_indices = @transform_0, window_bounds = array<i64: 128, 128>}, {pipeline_mode = #tpu.pipeline_mode<synchronous>, transform_indices = @transform_1, window_bounds = array<i64: 128, 128>}, {pipeline_mode = #tpu.pipeline_mode<synchronous>, transform_indices = @transform_2, window_bounds = array<i64: 128, 128>}, {pipeline_mode = #tpu.pipeline_mode<synchronous>, transform_indices = @transform_3, window_bounds = array<i64: 128, 128>}, {pipeline_mode = #tpu.pipeline_mode<synchronous>, transform_indices = @transform_4, window_bounds = array<i64: 1, 128>}, {transform_indices = @transform_5, window_bounds = array<i64: 128, 128>}]} {
    %c0_i32 = arith.constant 0 : i32
    %0 = arith.cmpi eq, %arg1, %c0_i32 : i32
    %1 = arith.extui %0 : i1 to i32
    %c0_i32_0 = arith.constant 0 : i32
    %2 = arith.cmpi ne, %1, %c0_i32_0 : i32
    scf.if %2 {
      %cst_10 = arith.constant 0.000000e+00 : f32
      %12 = vector.broadcast %cst_10 : f32 to vector<128x128xf32>
      %c0_11 = arith.constant 0 : index
      %c0_12 = arith.constant 0 : index
      %13 = vector.load %arg8[%c0_11, %c0_12] : memref<128x128xf32, #tpu.memory_space<vmem>>, vector<128x128xf32>
      tpu.vector_store %arg8[%c0_11, %c0_12], %12 {strides = array<i32>} : memref<128x128xf32, #tpu.memory_space<vmem>>, vector<128x128xf32>,
    } else {
    }
    %c0 = arith.constant 0 : index
    %c0_1 = arith.constant 0 : index
    %3 = vector.load %arg8[%c0, %c0_1] : memref<128x128xf32, #tpu.memory_space<vmem>>, vector<128x128xf32>
    %c0_2 = arith.constant 0 : index
    %c0_3 = arith.constant 0 : index
    %4 = vector.load %arg2[%c0_2, %c0_3] : memref<128x128xbf16, #tpu.memory_space<vmem>>, vector<128x128xbf16>
    %c0_4 = arith.constant 0 : index
    %c0_5 = arith.constant 0 : index
    %5 = vector.load %arg3[%c0_4, %c0_5] : memref<128x128xbf16, #tpu.memory_space<vmem>>, vector<128x128xbf16>
    %cst = arith.constant dense<0.000000e+00> : vector<128x128xf32>
    %6 = tpu.matmul %4, %5, %cst {dimension_numbers = #tpu.dot_dimension_numbers<[1], [0], [0], [1], [0, 0, 1, 1], [], []>} : vector<128x128xbf16>, vector<128x128xbf16>, vector<128x128xf32> -> vector<128x128xf32>
    %7 = arith.addf %3, %6 : vector<128x128xf32>
    %c0_6 = arith.constant 0 : index
    %c0_7 = arith.constant 0 : index
    %8 = vector.load %arg8[%c0_6, %c0_7] : memref<128x128xf32, #tpu.memory_space<vmem>>, vector<128x128xf32>
    tpu.vector_store %arg8[%c0_6, %c0_7], %7 {strides = array<i32>} : memref<128x128xf32, #tpu.memory_space<vmem>>, vector<128x128xf32>,
    %c0_i32_8 = arith.constant 0 : i32
    %9 = arith.cmpi eq, %arg1, %c0_i32_8 : i32
    %10 = arith.extui %9 : i1 to i32
    %c0_i32_9 = arith.constant 0 : i32
    %11 = arith.cmpi ne, %10, %c0_i32_9 : i32
    scf.if %11 {
      %c0_10 = arith.constant 0 : index
      %c0_11 = arith.constant 0 : index
      %12 = vector.load %arg8[%c0_10, %c0_11] : memref<128x128xf32, #tpu.memory_space<vmem>>, vector<128x128xf32>
      %13 = arith.truncf %12 : vector<128x128xf32> to vector<128x128xbf16>
      %c0_12 = arith.constant 0 : index
      %c0_13 = arith.constant 0 : index
      %14 = vector.load %arg4[%c0_12, %c0_13] : memref<128x128xbf16, #tpu.memory_space<vmem>>, vector<128x128xbf16>
      %cst_14 = arith.constant dense<0.000000e+00> : vector<128x128xf32>
      %15 = tpu.matmul %13, %14, %cst_14 {dimension_numbers = #tpu.dot_dimension_numbers<[1], [0], [0], [1], [0, 0, 1, 1], [], []>} : vector<128x128xbf16>, vector<128x128xbf16>, vector<128x128xf32> -> vector<128x128xf32>
      %c0_15 = arith.constant 0 : index
      %c0_16 = arith.constant 0 : index
      %16 = vector.load %arg6[%c0_15, %c0_16] : memref<1x128xf32, #tpu.memory_space<vmem>>, vector<1x128xf32>
      %17 = vector.broadcast %16 : vector<1x128xf32> to vector<128x128xf32>
      %18 = arith.addf %15, %17 : vector<128x128xf32>
      %cst_17 = arith.constant 0.000000e+00 : f32
      %19 = vector.broadcast %cst_17 : f32 to vector<128x128xf32>
      %20 = arith.maximumf %18, %19 : vector<128x128xf32>
      %21 = arith.truncf %20 : vector<128x128xf32> to vector<128x128xbf16>
      %c0_18 = arith.constant 0 : index
      %c0_19 = arith.constant 0 : index
      %22 = vector.load %arg5[%c0_18, %c0_19] : memref<128x128xbf16, #tpu.memory_space<vmem>>, vector<128x128xbf16>
      %cst_20 = arith.constant dense<0.000000e+00> : vector<128x128xf32>
      %23 = tpu.matmul %21, %22, %cst_20 {dimension_numbers = #tpu.dot_dimension_numbers<[1], [0], [0], [1], [0, 0, 1, 1], [], []>} : vector<128x128xbf16>, vector<128x128xbf16>, vector<128x128xf32> -> vector<128x128xf32>
      %24 = arith.truncf %23 : vector<128x128xf32> to vector<128x128xbf16>
      %c0_21 = arith.constant 0 : index
      %c0_22 = arith.constant 0 : index
      %25 = vector.load %arg7[%c0_21, %c0_22] : memref<128x128xbf16, #tpu.memory_space<vmem>>, vector<128x128xbf16>
      tpu.vector_store %arg7[%c0_21, %c0_22], %24 {strides = array<i32>} : memref<128x128xbf16, #tpu.memory_space<vmem>>, vector<128x128xbf16>,
    } else {
    }
    return
  }
  func.func @transform_0(%arg0: i32, %arg1: i32) -> (i32, i32) {
    %c0_i32 = arith.constant 0 : i32
    return %arg0, %arg1 : i32, i32
  }
  func.func @transform_1(%arg0: i32, %arg1: i32) -> (i32, i32) {
    %c0_i32 = arith.constant 0 : i32
    %c0_i32_0 = arith.constant 0 : i32
    %c0_i32_1 = arith.constant 0 : i32
    return %c0_i32, %c0_i32_0 : i32, i32
  }
  func.func @transform_2(%arg0: i32, %arg1: i32) -> (i32, i32) {
    %c0_i32 = arith.constant 0 : i32
    %c0_i32_0 = arith.constant 0 : i32
    %c0_i32_1 = arith.constant 0 : i32
    return %c0_i32, %c0_i32_0 : i32, i32
  }
  func.func @transform_3(%arg0: i32, %arg1: i32) -> (i32, i32) {
    %c0_i32 = arith.constant 0 : i32
    %c0_i32_0 = arith.constant 0 : i32
    %c0_i32_1 = arith.constant 0 : i32
    return %c0_i32, %c0_i32_0 : i32, i32
  }
  func.func @transform_4(%arg0: i32, %arg1: i32) -> (i32, i32) {
    %c0_i32 = arith.constant 0 : i32
    %c0_i32_0 = arith.constant 0 : i32
    %c0_i32_1 = arith.constant 0 : i32
    return %c0_i32, %c0_i32_0 : i32, i32
  }
  func.func @transform_5(%arg0: i32, %arg1: i32) -> (i32, i32) {
    %c0_i32 = arith.constant 0 : i32
    %c0_i32_0 = arith.constant 0 : i32
    return %arg0, %c0_i32 : i32, i32
  }
}

</mosaic_0001>

<llo_original>
// kernel: tpu_custom_call.1
$region0: #{tpu_custom_call.1}
  #allocation0 [shape = 'u32[]', space=smem, size = 0x4, offset = 0x4, fixed_abs, tag = 'smem constant byte address 0x4 - core index']
  #allocation1 [shape = 'u32[72,128]{1,0:T(1,128)}', space=vmem, size = 0x9000, scoped, tag = 'internal scratch']
  #allocation2 [shape = 'f32[128,128]{1,0:T(8,128)}', space=vmem, size = 0x10000, scoped, tag = 'scratch operand']
  %s0 = inlined_call_operand.hbm [shape: bf16[128,128], index: 0, kind: input, shape index: {}]
  %s1 = inlined_call_operand.hbm [shape: bf16[128,128], index: 1, kind: input, shape index: {}]
  %s2 = inlined_call_operand.hbm [shape: bf16[128,128], index: 2, kind: input, shape index: {}]
  %s3 = inlined_call_operand.hbm [shape: bf16[128,128], index: 3, kind: input, shape index: {}]
  %s4 = inlined_call_operand.vmem [shape: f32[1,128], index: 4, kind: input, shape index: {}]
  %s5 = inlined_call_operand.hbm [shape: bf16[128,128], index: 5, kind: output, shape index: {}]
  %s6 = sld [smem:[#allocation0]]
  $region54: #{tpu_custom_call.1} parent=0
    _
  %s8 = ssub.s32 1, %s6
  %s9 = scalar_select 0, %s8, %s6
  $region1: #{tpu_custom_call.1} parent=0
    #allocation3 [shape = 'u8[32768]{0}', space=vmem, size = 0x8000, scoped, tag = 'input window, operand 0, single buffered']
    #allocation4 [shape = 's32[1]{0}', space=sflag, size = 0x4, scoped, tag = 'scoped memory for tpu_custom_call.1']
    #allocation5 [shape = 's32[1]{0}', space=sflag, size = 0x4, scoped, tag = 'scoped memory for tpu_custom_call.1']
    #allocation6 [shape = 'u8[32768]{0}', space=vmem, size = 0x8000, scoped, tag = 'input window, operand 1, single buffered']
    #allocation7 [shape = 's32[1]{0}', space=sflag, size = 0x4, scoped, tag = 'scoped memory for tpu_custom_call.1']
    #allocation8 [shape = 'u8[32768]{0}', space=vmem, size = 0x8000, scoped, tag = 'input window, operand 2, single buffered']
    #allocation9 [shape = 'u8[32768]{0}', space=vmem, size = 0x8000, scoped, tag = 'input window, operand 3, single buffered']
    #allocation10 [shape = 's32[1]{0}', space=sflag, size = 0x4, scoped, tag = 'scoped memory for tpu_custom_call.1']
    #allocation11 [shape = 'u8[32768]{0}', space=vmem, size = 0x8000, scoped, tag = 'output window, operand 0, single buffered']
    %10 = vsyncpa [#allocation4], 0
    %11 = vsyncpa [#allocation7], 0
    %12 = vsyncpa [#allocation10], 0
    %13 = vsyncpa [#allocation5], 0
    // Predicated region
    $region2: #{tpu_custom_call.1} parent=1 // pred_check
      _
    $region3: #{tpu_custom_call.1} parent=1 // pred_check_branch
      %15 = sbr.rel (0) target = $region5
    $region4: #{tpu_custom_call.1} parent=1 // pred_region
      %17 = vsyncadd [#allocation4], 0
      %s18 = sshll.u32 %s0, 4
      %s19 = int_to_ptr.hbm [resolvable:$true] %s18
      %s20 = sshll.u32 [#allocation3], 4
      %s21 = int_to_ptr.vmem [resolvable:$true] %s20
      %26 = dma.hbm_to_vmem [thread:$0]  %s19, 1024, %s21, [#allocation4], 64, 64, 4
    $region5: #{tpu_custom_call.1} parent=1 // pred_fallthru
      _
    // Predicated region
    $region6: #{tpu_custom_call.1} parent=1 // pred_check
      _
    $region7: #{tpu_custom_call.1} parent=1 // pred_check_branch
      %28 = sbr.rel (0) target = $region9
    $region8: #{tpu_custom_call.1} parent=1 // pred_region
      %30 = vsyncadd [#allocation7], 0
      %s31 = sshll.u32 %s1, 4
      %s32 = int_to_ptr.hbm [resolvable:$true] %s31
      %s33 = sshll.u32 [#allocation6], 4
      %s34 = int_to_ptr.vmem [resolvable:$true] %s33
      %39 = dma.hbm_to_vmem [thread:$0]  %s32, 1024, %s34, [#allocation7], 64, 64, 4
    $region9: #{tpu_custom_call.1} parent=1 // pred_fallthru
      _
    // Predicated region
    $region10: #{tpu_custom_call.1} parent=1 // pred_check
      _
    $region11: #{tpu_custom_call.1} parent=1 // pred_check_branch
      %41 = sbr.rel (0) target = $region13
    $region12: #{tpu_custom_call.1} parent=1 // pred_region
      %43 = vsyncadd [#allocation7], 0
      %s44 = sshll.u32 %s2, 4
      %s45 = int_to_ptr.hbm [resolvable:$true] %s44
      %s46 = sshll.u32 [#allocation8], 4
      %s47 = int_to_ptr.vmem [resolvable:$true] %s46
      %52 = dma.hbm_to_vmem [thread:$0]  %s45, 1024, %s47, [#allocation7], 64, 64, 4
    $region13: #{tpu_custom_call.1} parent=1 // pred_fallthru
      _
    // Predicated region
    $region14: #{tpu_custom_call.1} parent=1 // pred_check
      _
    $region15: #{tpu_custom_call.1} parent=1 // pred_check_branch
      %54 = sbr.rel (0) target = $region17
    $region16: #{tpu_custom_call.1} parent=1 // pred_region
      %56 = vsyncadd [#allocation10], 0
      %s57 = sshll.u32 %s3, 4
      %s58 = int_to_ptr.hbm [resolvable:$true] %s57
      %s59 = sshll.u32 [#allocation9], 4
      %s60 = int_to_ptr.vmem [resolvable:$true] %s59
      %65 = dma.hbm_to_vmem [thread:$0]  %s58, 1024, %s60, [#allocation10], 64, 64, 4
    $region17: #{tpu_custom_call.1} parent=1 // pred_fallthru
      _
    // Predicated region
    $region18: #{tpu_custom_call.1} parent=1 // pred_check
      _
    $region19: #{tpu_custom_call.1} parent=1 // pred_check_branch
      %67 = sbr.rel (0) target = $region21
    $region20: #{tpu_custom_call.1} parent=1 // pred_region
      _
    $region21: #{tpu_custom_call.1} parent=1 // pred_fallthru
      _
    // Predicated region
    $region22: #{tpu_custom_call.1} parent=1 // pred_check
      _
    $region23: #{tpu_custom_call.1} parent=1 // pred_check_branch
      %69 = sbr.rel (0) target = $region25
    $region24: #{tpu_custom_call.1} parent=1 // pred_region
      %71 = dma.done [#allocation4], 1024
    $region25: #{tpu_custom_call.1} parent=1 // pred_fallthru
      _
    // Predicated region
    $region26: #{tpu_custom_call.1} parent=1 // pred_check
      _
    $region27: #{tpu_custom_call.1} parent=1 // pred_check_branch
      %73 = sbr.rel (0) target = $region29
    $region28: #{tpu_custom_call.1} parent=1 // pred_region
      %75 = dma.done [#allocation7], 1024
    $region29: #{tpu_custom_call.1} parent=1 // pred_fallthru
      _
    // Predicated region
    $region30: #{tpu_custom_call.1} parent=1 // pred_check
      _
    $region31: #{tpu_custom_call.1} parent=1 // pred_check_branch
      %77 = sbr.rel (0) target = $region33
    $region32: #{tpu_custom_call.1} parent=1 // pred_region
      %79 = dma.done [#allocation7], 1024
    $region33: #{tpu_custom_call.1} parent=1 // pred_fallthru
      _
    // Predicated region
    $region34: #{tpu_custom_call.1} parent=1 // pred_check
      _
    $region35: #{tpu_custom_call.1} parent=1 // pred_check_branch
      %81 = sbr.rel (0) target = $region37
    $region36: #{tpu_custom_call.1} parent=1 // pred_region
      %83 = dma.done [#allocation10], 1024
    $region37: #{tpu_custom_call.1} parent=1 // pred_fallthru
      _
    %p84 = scmp.eq.s32.totalorder 0, 0
    // Predicated region
    $region38: #{tpu_custom_call.1} parent=1 // pred_check
      %p85 = pneg %p84
    $region39: #{tpu_custom_call.1} parent=1 // pred_check_branch
      %87 = sbr.rel (%p85) target = $region41
    $region40: #{tpu_custom_call.1} parent=1 // pred_region
      %88 = vst [vmem:[#allocation2] sm:$0xff] 0.0
      %89 = vst [vmem:[#allocation2 + $0x8] sm:$0xff] 0.0
      %90 = vst [vmem:[#allocation2 + $0x10] sm:$0xff] 0.0
      %91 = vst [vmem:[#allocation2 + $0x18] sm:$0xff] 0.0
      %92 = vst [vmem:[#allocation2 + $0x20] sm:$0xff] 0.0
      %93 = vst [vmem:[#allocation2 + $0x28] sm:$0xff] 0.0
      %94 = vst [vmem:[#allocation2 + $0x30] sm:$0xff] 0.0
      %95 = vst [vmem:[#allocation2 + $0x38] sm:$0xff] 0.0
      %96 = vst [vmem:[#allocation2 + $0x40] sm:$0xff] 0.0
      %97 = vst [vmem:[#allocation2 + $0x48] sm:$0xff] 0.0
      %98 = vst [vmem:[#allocation2 + $0x50] sm:$0xff] 0.0
      %99 = vst [vmem:[#allocation2 + $0x58] sm:$0xff] 0.0
      %100 = vst [vmem:[#allocation2 + $0x60] sm:$0xff] 0.0
      %101 = vst [vmem:[#allocation2 + $0x68] sm:$0xff] 0.0
      %102 = vst [vmem:[#allocation2 + $0x70] sm:$0xff] 0.0
      %103 = vst [vmem:[#allocation2 + $0x78] sm:$0xff] 0.0
    $region41: #{tpu_custom_call.1} parent=1 // pred_fallthru
      _
    %v104 = vld [vmem:[#allocation2] sm:$0xff]
    %v105 = vld [vmem:[#allocation2 + $0x8] sm:$0xff]
    %v106 = vld [vmem:[#allocation2 + $0x10] sm:$0xff]
    %v107 = vld [vmem:[#allocation2 + $0x18] sm:$0xff]
    %v108 = vld [vmem:[#allocation2 + $0x20] sm:$0xff]
    %v109 = vld [vmem:[#allocation2 + $0x28] sm:$0xff]
    %v110 = vld [vmem:[#allocation2 + $0x30] sm:$0xff]
    %v111 = vld [vmem:[#allocation2 + $0x38] sm:$0xff]
    %v112 = vld [vmem:[#allocation2 + $0x40] sm:$0xff]
    %v113 = vld [vmem:[#allocation2 + $0x48] sm:$0xff]
    %v114 = vld [vmem:[#allocation2 + $0x50] sm:$0xff]
    %v115 = vld [vmem:[#allocation2 + $0x58] sm:$0xff]
    %v116 = vld [vmem:[#allocation2 + $0x60] sm:$0xff]
    %v117 = vld [vmem:[#allocation2 + $0x68] sm:$0xff]
    %v118 = vld [vmem:[#allocation2 + $0x70] sm:$0xff]
    %v119 = vld [vmem:[#allocation2 + $0x78] sm:$0xff]
    %v120 = vld [vmem:[#allocation3] sm:$0xf]
    %v121 = vld [vmem:[#allocation3 + $0x4] sm:$0xf]
    %v122 = vld [vmem:[#allocation3 + $0x8] sm:$0xf]
    %v123 = vld [vmem:[#allocation3 + $0xc] sm:$0xf]
    %v124 = vld [vmem:[#allocation3 + $0x10] sm:$0xf]
    %v125 = vld [vmem:[#allocation3 + $0x14] sm:$0xf]
    %v126 = vld [vmem:[#allocation3 + $0x18] sm:$0xf]
    %v127 = vld [vmem:[#allocation3 + $0x1c] sm:$0xf]
    %v128 = vld [vmem:[#allocation3 + $0x20] sm:$0xf]
    %v129 = vld [vmem:[#allocation3 + $0x24] sm:$0xf]
    %v130 = vld [vmem:[#allocation3 + $0x28] sm:$0xf]
    %v131 = vld [vmem:[#allocation3 + $0x2c] sm:$0xf]
    %v132 = vld [vmem:[#allocation3 + $0x30] sm:$0xf]
    %v133 = vld [vmem:[#allocation3 + $0x34] sm:$0xf]
    %v134 = vld [vmem:[#allocation3 + $0x38] sm:$0xf]
    %v135 = vld [vmem:[#allocation3 + $0x3c] sm:$0xf]
    %v136 = vld [vmem:[#allocation6] sm:$0xf]
    %v137 = vld [vmem:[#allocation6 + $0x4] sm:$0xf]
    %v138 = vld [vmem:[#allocation6 + $0x8] sm:$0xf]
    %v139 = vld [vmem:[#allocation6 + $0xc] sm:$0xf]
    %v140 = vld [vmem:[#allocation6 + $0x10] sm:$0xf]
    %v141 = vld [vmem:[#allocation6 + $0x14] sm:$0xf]
    %v142 = vld [vmem:[#allocation6 + $0x18] sm:$0xf]
    %v143 = vld [vmem:[#allocation6 + $0x1c] sm:$0xf]
    %v144 = vld [vmem:[#allocation6 + $0x20] sm:$0xf]
    %v145 = vld [vmem:[#allocation6 + $0x24] sm:$0xf]
    %v146 = vld [vmem:[#allocation6 + $0x28] sm:$0xf]
    %v147 = vld [vmem:[#allocation6 + $0x2c] sm:$0xf]
    %v148 = vld [vmem:[#allocation6 + $0x30] sm:$0xf]
    %v149 = vld [vmem:[#allocation6 + $0x34] sm:$0xf]
    %v150 = vld [vmem:[#allocation6 + $0x38] sm:$0xf]
    %v151 = vld [vmem:[#allocation6 + $0x3c] sm:$0xf]
    %v168 = vunpack.c.l.b16 %v120
    %v169 = vunpack.c.l.b16 %v121
    %v170 = vunpack.c.l.b16 %v122
    %v171 = vunpack.c.l.b16 %v123
    %v172 = vunpack.c.l.b16 %v124
    %v173 = vunpack.c.l.b16 %v125
    %v174 = vunpack.c.l.b16 %v126
    %v175 = vunpack.c.l.b16 %v127
    %v176 = vunpack.c.l.b16 %v128
    %v177 = vunpack.c.l.b16 %v129
    %v178 = vunpack.c.l.b16 %v130
    %v179 = vunpack.c.l.b16 %v131
    %v180 = vunpack.c.l.b16 %v132
    %v181 = vunpack.c.l.b16 %v133
    %v182 = vunpack.c.l.b16 %v134
    %v183 = vunpack.c.l.b16 %v135
    %v184 = vpack.c.b16 %v169, %v168
    %v185 = vpack.c.b16 %v171, %v170
    %v186 = vpack.c.b16 %v173, %v172
    %v187 = vpack.c.b16 %v175, %v174
    %v188 = vpack.c.b16 %v177, %v176
    %v189 = vpack.c.b16 %v179, %v178
    %v190 = vpack.c.b16 %v181, %v180
    %v191 = vpack.c.b16 %v183, %v182
    %v216 = vunpack.c.l.b16 %v136
    %v217 = vunpack.c.l.b16 %v137
    %v218 = vunpack.c.l.b16 %v138
    %v219 = vunpack.c.l.b16 %v139
    %v220 = vunpack.c.l.b16 %v140
    %v221 = vunpack.c.l.b16 %v141
    %v222 = vunpack.c.l.b16 %v142
    %v223 = vunpack.c.l.b16 %v143
    %v224 = vunpack.c.l.b16 %v144
    %v225 = vunpack.c.l.b16 %v145
    %v226 = vunpack.c.l.b16 %v146
    %v227 = vunpack.c.l.b16 %v147
    %v228 = vunpack.c.l.b16 %v148
    %v229 = vunpack.c.l.b16 %v149
    %v230 = vunpack.c.l.b16 %v150
    %v231 = vunpack.c.l.b16 %v151
    %v232 = vpack.c.b16 %v217, %v216
    %v233 = vpack.c.b16 %v219, %v218
    %v234 = vpack.c.b16 %v221, %v220
    %v235 = vpack.c.b16 %v223, %v222
    %v236 = vpack.c.b16 %v225, %v224
    %v237 = vpack.c.b16 %v227, %v226
    %v238 = vpack.c.b16 %v229, %v228
    %v239 = vpack.c.b16 %v231, %v230
    %248 = vmatpush.bf16.msra.mxu0 %v239
    %249 = vmatpush.bf16.msra.mxu0 %v238
    %250 = vmatpush.bf16.msra.mxu0 %v237
    %251 = vmatpush.bf16.msra.mxu0 %v236
    %252 = vmatpush.bf16.msra.mxu0 %v235
    %253 = vmatpush.bf16.msra.mxu0 %v234
    %254 = vmatpush.bf16.msra.mxu0 %v233
    %255 = vmatpush.bf16.msra.mxu0 %v232
    %256 = vmatmul.bf16.gmra.mxu0 %v184
    %v257 = vpop.f32.mrf.mxu0
    %v258 = vadd.f32 0.0, %v257
    %v259 = vpop.f32.mrf.mxu0
    %v260 = vadd.f32 0.0, %v259
    %261 = vmatmul.bf16.gmra.mxu0 %v185
    %v262 = vpop.f32.mrf.mxu0
    %v263 = vadd.f32 0.0, %v262
    %v264 = vpop.f32.mrf.mxu0
    %v265 = vadd.f32 0.0, %v264
    %266 = vmatmul.bf16.gmra.mxu0 %v186
    %v267 = vpop.f32.mrf.mxu0
    %v268 = vadd.f32 0.0, %v267
    %v269 = vpop.f32.mrf.mxu0
    %v270 = vadd.f32 0.0, %v269
    %271 = vmatmul.bf16.gmra.mxu0 %v187
    %v272 = vpop.f32.mrf.mxu0
    %v273 = vadd.f32 0.0, %v272
    %v274 = vpop.f32.mrf.mxu0
    %v275 = vadd.f32 0.0, %v274
    %276 = vmatmul.bf16.gmra.mxu0 %v188
    %v277 = vpop.f32.mrf.mxu0
    %v278 = vadd.f32 0.0, %v277
    %v279 = vpop.f32.mrf.mxu0
    %v280 = vadd.f32 0.0, %v279
    %281 = vmatmul.bf16.gmra.mxu0 %v189
    %v282 = vpop.f32.mrf.mxu0
    %v283 = vadd.f32 0.0, %v282
    %v284 = vpop.f32.mrf.mxu0
    %v285 = vadd.f32 0.0, %v284
    %286 = vmatmul.bf16.gmra.mxu0 %v190
    %v287 = vpop.f32.mrf.mxu0
    %v288 = vadd.f32 0.0, %v287
    %v289 = vpop.f32.mrf.mxu0
    %v290 = vadd.f32 0.0, %v289
    %291 = vmatmul.bf16.gmra.mxu0 %v191
    %v292 = vpop.f32.mrf.mxu0
    %v293 = vadd.f32 0.0, %v292
    %v294 = vpop.f32.mrf.mxu0
    %v295 = vadd.f32 0.0, %v294
    %296 = vdwg.mxu0
    %v297 = vadd.f32 %v104, %v258
    %v298 = vadd.f32 %v105, %v260
    %v299 = vadd.f32 %v106, %v263
    %v300 = vadd.f32 %v107, %v265
    %v301 = vadd.f32 %v108, %v268
    %v302 = vadd.f32 %v109, %v270
    %v303 = vadd.f32 %v110, %v273
    %v304 = vadd.f32 %v111, %v275
    %v305 = vadd.f32 %v112, %v278
    %v306 = vadd.f32 %v113, %v280
    %v307 = vadd.f32 %v114, %v283
    %v308 = vadd.f32 %v115, %v285
    %v309 = vadd.f32 %v116, %v288
    %v310 = vadd.f32 %v117, %v290
    %v311 = vadd.f32 %v118, %v293
    %v312 = vadd.f32 %v119, %v295
    %313 = vst [vmem:[#allocation2] sm:$0xff] %v297
    %314 = vst [vmem:[#allocation2 + $0x8] sm:$0xff] %v298
    %315 = vst [vmem:[#allocation2 + $0x10] sm:$0xff] %v299
    %316 = vst [vmem:[#allocation2 + $0x18] sm:$0xff] %v300
    %317 = vst [vmem:[#allocation2 + $0x20] sm:$0xff] %v301
    %318 = vst [vmem:[#allocation2 + $0x28] sm:$0xff] %v302
    %319 = vst [vmem:[#allocation2 + $0x30] sm:$0xff] %v303
    %320 = vst [vmem:[#allocation2 + $0x38] sm:$0xff] %v304
    %321 = vst [vmem:[#allocation2 + $0x40] sm:$0xff] %v305
    %322 = vst [vmem:[#allocation2 + $0x48] sm:$0xff] %v306
    %323 = vst [vmem:[#allocation2 + $0x50] sm:$0xff] %v307
    %324 = vst [vmem:[#allocation2 + $0x58] sm:$0xff] %v308
    %325 = vst [vmem:[#allocation2 + $0x60] sm:$0xff] %v309
    %326 = vst [vmem:[#allocation2 + $0x68] sm:$0xff] %v310
    %327 = vst [vmem:[#allocation2 + $0x70] sm:$0xff] %v311
    %328 = vst [vmem:[#allocation2 + $0x78] sm:$0xff] %v312
    // Predicated region
    $region42: #{tpu_custom_call.1} parent=1 // pred_check
      %p329 = pneg %p84
    $region43: #{tpu_custom_call.1} parent=1 // pred_check_branch
      %331 = sbr.rel (%p329) target = $region45
    $region44: #{tpu_custom_call.1} parent=1 // pred_region
      %v332 = vld [vmem:[#allocation2] sm:$0xff]
      %v333 = vld [vmem:[#allocation2 + $0x8] sm:$0xff]
      %v334 = vld [vmem:[#allocation2 + $0x10] sm:$0xff]
      %v335 = vld [vmem:[#allocation2 + $0x18] sm:$0xff]
      %v336 = vld [vmem:[#allocation2 + $0x20] sm:$0xff]
      %v337 = vld [vmem:[#allocation2 + $0x28] sm:$0xff]
      %v338 = vld [vmem:[#allocation2 + $0x30] sm:$0xff]
      %v339 = vld [vmem:[#allocation2 + $0x38] sm:$0xff]
      %v340 = vld [vmem:[#allocation2 + $0x40] sm:$0xff]
      %v341 = vld [vmem:[#allocation2 + $0x48] sm:$0xff]
      %v342 = vld [vmem:[#allocation2 + $0x50] sm:$0xff]
      %v343 = vld [vmem:[#allocation2 + $0x58] sm:$0xff]
      %v344 = vld [vmem:[#allocation2 + $0x60] sm:$0xff]
      %v345 = vld [vmem:[#allocation2 + $0x68] sm:$0xff]
      %v346 = vld [vmem:[#allocation2 + $0x70] sm:$0xff]
      %v347 = vld [vmem:[#allocation2 + $0x78] sm:$0xff]
      %v348 = vpack.c.bf16 %v333, %v332
      %v349 = vpack.c.bf16 %v335, %v334
      %v350 = vpack.c.bf16 %v337, %v336
      %v351 = vpack.c.bf16 %v339, %v338
      %v352 = vpack.c.bf16 %v341, %v340
      %v353 = vpack.c.bf16 %v343, %v342
      %v354 = vpack.c.bf16 %v345, %v344
      %v355 = vpack.c.bf16 %v347, %v346
      %v356 = vld [vmem:[#allocation8] sm:$0xf]
      %v357 = vld [vmem:[#allocation8 + $0x4] sm:$0xf]
      %v358 = vld [vmem:[#allocation8 + $0x8] sm:$0xf]
      %v359 = vld [vmem:[#allocation8 + $0xc] sm:$0xf]
      %v360 = vld [vmem:[#allocation8 + $0x10] sm:$0xf]
      %v361 = vld [vmem:[#allocation8 + $0x14] sm:$0xf]
      %v362 = vld [vmem:[#allocation8 + $0x18] sm:$0xf]
      %v363 = vld [vmem:[#allocation8 + $0x1c] sm:$0xf]
      %v364 = vld [vmem:[#allocation8 + $0x20] sm:$0xf]
      %v365 = vld [vmem:[#allocation8 + $0x24] sm:$0xf]
      %v366 = vld [vmem:[#allocation8 + $0x28] sm:$0xf]
      %v367 = vld [vmem:[#allocation8 + $0x2c] sm:$0xf]
      %v368 = vld [vmem:[#allocation8 + $0x30] sm:$0xf]
      %v369 = vld [vmem:[#allocation8 + $0x34] sm:$0xf]
      %v370 = vld [vmem:[#allocation8 + $0x38] sm:$0xf]
      %v371 = vld [vmem:[#allocation8 + $0x3c] sm:$0xf]
      %v372 = vld [vmem:[%s4] sm:$0x1]
      %v374 = vperm.slane %v372, 0
      %v392 = vunpack.c.l.b16 %v356
      %v393 = vunpack.c.l.b16 %v357
      %v394 = vunpack.c.l.b16 %v358
      %v395 = vunpack.c.l.b16 %v359
      %v396 = vunpack.c.l.b16 %v360
      %v397 = vunpack.c.l.b16 %v361
      %v398 = vunpack.c.l.b16 %v362
      %v399 = vunpack.c.l.b16 %v363
      %v400 = vunpack.c.l.b16 %v364
      %v401 = vunpack.c.l.b16 %v365
      %v402 = vunpack.c.l.b16 %v366
      %v403 = vunpack.c.l.b16 %v367
      %v404 = vunpack.c.l.b16 %v368
      %v405 = vunpack.c.l.b16 %v369
      %v406 = vunpack.c.l.b16 %v370
      %v407 = vunpack.c.l.b16 %v371
      %v408 = vpack.c.b16 %v393, %v392
      %v409 = vpack.c.b16 %v395, %v394
      %v410 = vpack.c.b16 %v397, %v396
      %v411 = vpack.c.b16 %v399, %v398
      %v412 = vpack.c.b16 %v401, %v400
      %v413 = vpack.c.b16 %v403, %v402
      %v414 = vpack.c.b16 %v405, %v404
      %v415 = vpack.c.b16 %v407, %v406
      %424 = vmatpush.bf16.msra.mxu0 %v415
      %425 = vmatpush.bf16.msra.mxu0 %v414
      %426 = vmatpush.bf16.msra.mxu0 %v413
      %427 = vmatpush.bf16.msra.mxu0 %v412
      %428 = vmatpush.bf16.msra.mxu0 %v411
      %429 = vmatpush.bf16.msra.mxu0 %v410
      %430 = vmatpush.bf16.msra.mxu0 %v409
      %431 = vmatpush.bf16.msra.mxu0 %v408
      %432 = vmatmul.bf16.gmra.mxu0 %v348
      %v433 = vpop.f32.mrf.mxu0
      %v434 = vadd.f32 %v374, %v433
      %v435 = vpop.f32.mrf.mxu0
      %v436 = vadd.f32 %v374, %v435
      %437 = vmatmul.bf16.gmra.mxu0 %v349
      %v438 = vpop.f32.mrf.mxu0
      %v439 = vadd.f32 %v374, %v438
      %v440 = vpop.f32.mrf.mxu0
      %v441 = vadd.f32 %v374, %v440
      %442 = vmatmul.bf16.gmra.mxu0 %v350
      %v443 = vpop.f32.mrf.mxu0
      %v444 = vadd.f32 %v374, %v443
      %v445 = vpop.f32.mrf.mxu0
      %v446 = vadd.f32 %v374, %v445
      %447 = vmatmul.bf16.gmra.mxu0 %v351
      %v448 = vpop.f32.mrf.mxu0
      %v449 = vadd.f32 %v374, %v448
      %v450 = vpop.f32.mrf.mxu0
      %v451 = vadd.f32 %v374, %v450
      %452 = vmatmul.bf16.gmra.mxu0 %v352
      %v453 = vpop.f32.mrf.mxu0
      %v454 = vadd.f32 %v374, %v453
      %v455 = vpop.f32.mrf.mxu0
      %v456 = vadd.f32 %v374, %v455
      %457 = vmatmul.bf16.gmra.mxu0 %v353
      %v458 = vpop.f32.mrf.mxu0
      %v459 = vadd.f32 %v374, %v458
      %v460 = vpop.f32.mrf.mxu0
      %v461 = vadd.f32 %v374, %v460
      %462 = vmatmul.bf16.gmra.mxu0 %v354
      %v463 = vpop.f32.mrf.mxu0
      %v464 = vadd.f32 %v374, %v463
      %v465 = vpop.f32.mrf.mxu0
      %v466 = vadd.f32 %v374, %v465
      %467 = vmatmul.bf16.gmra.mxu0 %v355
      %v468 = vpop.f32.mrf.mxu0
      %v469 = vadd.f32 %v374, %v468
      %v470 = vpop.f32.mrf.mxu0
      %v471 = vadd.f32 %v374, %v470
      %472 = vdwg.mxu0
      %v473 = vmax.f32 %v434, 0.0
      %v474 = vmax.f32 %v436, 0.0
      %v475 = vmax.f32 %v439, 0.0
      %v476 = vmax.f32 %v441, 0.0
      %v477 = vmax.f32 %v444, 0.0
      %v478 = vmax.f32 %v446, 0.0
      %v479 = vmax.f32 %v449, 0.0
      %v480 = vmax.f32 %v451, 0.0
      %v481 = vmax.f32 %v454, 0.0
      %v482 = vmax.f32 %v456, 0.0
      %v483 = vmax.f32 %v459, 0.0
      %v484 = vmax.f32 %v461, 0.0
      %v485 = vmax.f32 %v464, 0.0
      %v486 = vmax.f32 %v466, 0.0
      %v487 = vmax.f32 %v469, 0.0
      %v488 = vmax.f32 %v471, 0.0
      %v489 = vpack.c.bf16 %v474, %v473
      %v490 = vpack.c.bf16 %v476, %v475
      %v491 = vpack.c.bf16 %v478, %v477
      %v492 = vpack.c.bf16 %v480, %v479
      %v493 = vpack.c.bf16 %v482, %v481
      %v494 = vpack.c.bf16 %v484, %v483
      %v495 = vpack.c.bf16 %v486, %v485
      %v496 = vpack.c.bf16 %v488, %v487
      %v497 = vld [vmem:[#allocation9] sm:$0xf]
      %v498 = vld [vmem:[#allocation9 + $0x4] sm:$0xf]
      %v499 = vld [vmem:[#allocation9 + $0x8] sm:$0xf]
      %v500 = vld [vmem:[#allocation9 + $0xc] sm:$0xf]
      %v501 = vld [vmem:[#allocation9 + $0x10] sm:$0xf]
      %v502 = vld [vmem:[#allocation9 + $0x14] sm:$0xf]
      %v503 = vld [vmem:[#allocation9 + $0x18] sm:$0xf]
      %v504 = vld [vmem:[#allocation9 + $0x1c] sm:$0xf]
      %v505 = vld [vmem:[#allocation9 + $0x20] sm:$0xf]
      %v506 = vld [vmem:[#allocation9 + $0x24] sm:$0xf]
      %v507 = vld [vmem:[#allocation9 + $0x28] sm:$0xf]
      %v508 = vld [vmem:[#allocation9 + $0x2c] sm:$0xf]
      %v509 = vld [vmem:[#allocation9 + $0x30] sm:$0xf]
      %v510 = vld [vmem:[#allocation9 + $0x34] sm:$0xf]
      %v511 = vld [vmem:[#allocation9 + $0x38] sm:$0xf]
      %v512 = vld [vmem:[#allocation9 + $0x3c] sm:$0xf]
      %v529 = vunpack.c.l.b16 %v497
      %v530 = vunpack.c.l.b16 %v498
      %v531 = vunpack.c.l.b16 %v499
      %v532 = vunpack.c.l.b16 %v500
      %v533 = vunpack.c.l.b16 %v501
      %v534 = vunpack.c.l.b16 %v502
      %v535 = vunpack.c.l.b16 %v503
      %v536 = vunpack.c.l.b16 %v504
      %v537 = vunpack.c.l.b16 %v505
      %v538 = vunpack.c.l.b16 %v506
      %v539 = vunpack.c.l.b16 %v507
      %v540 = vunpack.c.l.b16 %v508
      %v541 = vunpack.c.l.b16 %v509
      %v542 = vunpack.c.l.b16 %v510
      %v543 = vunpack.c.l.b16 %v511
      %v544 = vunpack.c.l.b16 %v512
      %v545 = vpack.c.b16 %v530, %v529
      %v546 = vpack.c.b16 %v532, %v531
      %v547 = vpack.c.b16 %v534, %v533
      %v548 = vpack.c.b16 %v536, %v535
      %v549 = vpack.c.b16 %v538, %v537
      %v550 = vpack.c.b16 %v540, %v539
      %v551 = vpack.c.b16 %v542, %v541
      %v552 = vpack.c.b16 %v544, %v543
      %561 = vmatpush.bf16.msra.mxu0 %v552
      %562 = vmatpush.bf16.msra.mxu0 %v551
      %563 = vmatpush.bf16.msra.mxu0 %v550
      %564 = vmatpush.bf16.msra.mxu0 %v549
      %565 = vmatpush.bf16.msra.mxu0 %v548
      %566 = vmatpush.bf16.msra.mxu0 %v547
      %567 = vmatpush.bf16.msra.mxu0 %v546
      %568 = vmatpush.bf16.msra.mxu0 %v545
      %569 = vmatmul.bf16.gmra.mxu0 %v489
      %v570 = vpop.f32.mrf.mxu0
      %v571 = vadd.f32 0.0, %v570
      %v572 = vpop.f32.mrf.mxu0
      %v573 = vadd.f32 0.0, %v572
      %574 = vmatmul.bf16.gmra.mxu0 %v490
      %v575 = vpop.f32.mrf.mxu0
      %v576 = vadd.f32 0.0, %v575
      %v577 = vpop.f32.mrf.mxu0
      %v578 = vadd.f32 0.0, %v577
      %579 = vmatmul.bf16.gmra.mxu0 %v491
      %v580 = vpop.f32.mrf.mxu0
      %v581 = vadd.f32 0.0, %v580
      %v582 = vpop.f32.mrf.mxu0
      %v583 = vadd.f32 0.0, %v582
      %584 = vmatmul.bf16.gmra.mxu0 %v492
      %v585 = vpop.f32.mrf.mxu0
      %v586 = vadd.f32 0.0, %v585
      %v587 = vpop.f32.mrf.mxu0
      %v588 = vadd.f32 0.0, %v587
      %589 = vmatmul.bf16.gmra.mxu0 %v493
      %v590 = vpop.f32.mrf.mxu0
      %v591 = vadd.f32 0.0, %v590
      %v592 = vpop.f32.mrf.mxu0
      %v593 = vadd.f32 0.0, %v592
      %594 = vmatmul.bf16.gmra.mxu0 %v494
      %v595 = vpop.f32.mrf.mxu0
      %v596 = vadd.f32 0.0, %v595
      %v597 = vpop.f32.mrf.mxu0
      %v598 = vadd.f32 0.0, %v597
      %599 = vmatmul.bf16.gmra.mxu0 %v495
      %v600 = vpop.f32.mrf.mxu0
      %v601 = vadd.f32 0.0, %v600
      %v602 = vpop.f32.mrf.mxu0
      %v603 = vadd.f32 0.0, %v602
      %604 = vmatmul.bf16.gmra.mxu0 %v496
      %v605 = vpop.f32.mrf.mxu0
      %v606 = vadd.f32 0.0, %v605
      %v607 = vpop.f32.mrf.mxu0
      %v608 = vadd.f32 0.0, %v607
      %609 = vdwg.mxu0
      %v610 = vpack.c.bf16 %v571, %v571
      %v611 = vpack.c.bf16 %v573, %v573
      %v612 = vpack.c.bf16 %v576, %v576
      %v613 = vpack.c.bf16 %v578, %v578
      %v614 = vpack.c.bf16 %v581, %v581
      %v615 = vpack.c.bf16 %v583, %v583
      %v616 = vpack.c.bf16 %v586, %v586
      %v617 = vpack.c.bf16 %v588, %v588
      %v618 = vpack.c.bf16 %v591, %v591
      %v619 = vpack.c.bf16 %v593, %v593
      %v620 = vpack.c.bf16 %v596, %v596
      %v621 = vpack.c.bf16 %v598, %v598
      %v622 = vpack.c.bf16 %v601, %v601
      %v623 = vpack.c.bf16 %v603, %v603
      %v624 = vpack.c.bf16 %v606, %v606
      %v625 = vpack.c.bf16 %v608, %v608
      %626 = vst [vmem:[#allocation11] sm:$0xf] %v610
      %627 = vst [vmem:[#allocation11 + $0x4] sm:$0xf] %v611
      %628 = vst [vmem:[#allocation11 + $0x8] sm:$0xf] %v612
      %629 = vst [vmem:[#allocation11 + $0xc] sm:$0xf] %v613
      %630 = vst [vmem:[#allocation11 + $0x10] sm:$0xf] %v614
      %631 = vst [vmem:[#allocation11 + $0x14] sm:$0xf] %v615
      %632 = vst [vmem:[#allocation11 + $0x18] sm:$0xf] %v616
      %633 = vst [vmem:[#allocation11 + $0x1c] sm:$0xf] %v617
      %634 = vst [vmem:[#allocation11 + $0x20] sm:$0xf] %v618
      %635 = vst [vmem:[#allocation11 + $0x24] sm:$0xf] %v619
      %636 = vst [vmem:[#allocation11 + $0x28] sm:$0xf] %v620
      %637 = vst [vmem:[#allocation11 + $0x2c] sm:$0xf] %v621
      %638 = vst [vmem:[#allocation11 + $0x30] sm:$0xf] %v622
      %639 = vst [vmem:[#allocation11 + $0x34] sm:$0xf] %v623
      %640 = vst [vmem:[#allocation11 + $0x38] sm:$0xf] %v624
      %641 = vst [vmem:[#allocation11 + $0x3c] sm:$0xf] %v625
    $region45: #{tpu_custom_call.1} parent=1 // pred_fallthru
      _
    // Predicated region
    $region46: #{tpu_custom_call.1} parent=1 // pred_check
      _
    $region47: #{tpu_custom_call.1} parent=1 // pred_check_branch
      %643 = sbr.rel (0) target = $region49
    $region48: #{tpu_custom_call.1} parent=1 // pred_region
      %645 = vsyncadd [#allocation5], 0
      %s646 = sshll.u32 [#allocation11], 4
      %s647 = int_to_ptr.vmem [resolvable:$true] %s646
      %s648 = sshll.u32 %s5, 4
      %s649 = int_to_ptr.hbm [resolvable:$true] %s648
      %654 = dma.vmem_to_hbm [thread:$0]  %s647, 1024, %s649, [#allocation5], 64, 64, 4
    $region49: #{tpu_custom_call.1} parent=1 // pred_fallthru
      _
    // Predicated region
    $region50: #{tpu_custom_call.1} parent=1 // pred_check
      _
    $region51: #{tpu_custom_call.1} parent=1 // pred_check_branch
      %656 = sbr.rel (0) target = $region53
    $region52: #{tpu_custom_call.1} parent=1 // pred_region
      %658 = dma.done [#allocation5], 1024
    $region53: #{tpu_custom_call.1} parent=1 // pred_fallthru
      _
    %659 = vsyncpa [#allocation4], 1
    %660 = vsyncpa [#allocation7], 1
    %661 = vsyncpa [#allocation10], 1
    %662 = vsyncpa [#allocation5], 1

</llo_original>
